<compile_context>
chip_gen: v7x
topology: tpu7x:2x2x1
jax: 0.10.0
libtpu: 0.0.40
codegen_flags: <defaults>
</compile_context>

<pallas_src>
import functools

import jax
import jax.numpy as jnp
from jax import lax
from jax.experimental import pallas as pl
from jax.experimental.pallas import tpu as pltpu

LANE = 128            # TPU lane width
SUBLANE_BF16 = 16     # bf16 sublane packing multiple
OUT_DIM = 6           # 3 translation + 3 rotation score components
OUT_PAD = LANE        # lane-dense padded output head


def _round_up(x, m):
    return ((x + m - 1) // m) * m


def _score_kernel(x_ref, w1_ref, b1_ref, w2_ref, b2_ref, w3_ref,
                  o_ref, acc_ref, *, n_valid, tile_n, steps_per_core,
                  needs_mask):
    c = pl.program_id(0)   # core-split axis ("parallel")
    i = pl.program_id(1)   # residue-tile axis ("arbitrary", reduction)

    @pl.when(i == 0)
    def _init():
        acc_ref[...] = jnp.zeros_like(acc_ref)

    # Layer 1: bf16 MXU matmul (K = true feature dim), f32 accumulation;
    # bias + ReLU on the VPU in f32.
    h = jnp.dot(x_ref[...], w1_ref[...], preferred_element_type=jnp.float32)
    h = jnp.maximum(h + b1_ref[...], 0.0)

    # Layer 2.
    h2 = jnp.dot(h.astype(w2_ref.dtype), w2_ref[...],
                 preferred_element_type=jnp.float32)
    h2 = jnp.maximum(h2 + b2_ref[...], 0.0)

    # Pool-before-head: the mean pool commutes with the linear head, so we
    # only accumulate the row-sum of the layer-2 activations here; the head
    # matmul happens once per core in the finalize branch.
    if needs_mask:
        tile_start = (c * steps_per_core + i) * tile_n
        crosses = tile_start + tile_n > n_valid

        @pl.when(crosses)
        def _masked_accum():
            row = tile_start + lax.broadcasted_iota(jnp.int32, (tile_n, 1), 0)
            acc_ref[...] += jnp.sum(jnp.where(row < n_valid, h2, 0.0),
                                    axis=0, keepdims=True)

        @pl.when(jnp.logical_not(crosses))
        def _plain_accum():
            acc_ref[...] += jnp.sum(h2, axis=0, keepdims=True)
    else:
        acc_ref[...] += jnp.sum(h2, axis=0, keepdims=True)

    @pl.when(i == steps_per_core - 1)
    def _finalize():
        # Tiny M=1 head matmul, kept in f32 (negligible cost, no precision
        # loss).  1/N scaling and the head bias are applied in the wrapper
        # when the per-core partials are combined.
        o_ref[0] = jnp.dot(acc_ref[...], w3_ref[...],
                           preferred_element_type=jnp.float32)


def pack_params(params):
    """One-off padding / bf16 packing of the weights (hoisted out of forward)."""
    w1, b1, w2, b2, w3, b3 = params
    f, h = w1.shape
    f_pad = _round_up(f, SUBLANE_BF16)            # sublane multiple only, no 128-lane pad
    h_pad = _round_up(max(h, LANE), LANE)

    w1_p = jnp.zeros((f_pad, h_pad), jnp.bfloat16).at[:f, :h].set(
        w1.astype(jnp.bfloat16))
    b1_p = jnp.zeros((1, h_pad), jnp.float32).at[:, :h].set(
        b1.reshape(1, h).astype(jnp.float32))
    w2_p = jnp.zeros((h_pad, h_pad), jnp.bfloat16).at[:h, :h].set(
        w2.astype(jnp.bfloat16))
    b2_p = jnp.zeros((1, h_pad), jnp.float32).at[:, :h].set(
        b2.reshape(1, h).astype(jnp.float32))
    w3_p = jnp.zeros((h_pad, OUT_PAD), jnp.float32).at[:h, :OUT_DIM].set(
        w3.astype(jnp.float32))
    b3_p = b3.reshape(1, OUT_DIM).astype(jnp.float32)
    return (w1_p, b1_p, w2_p, b2_p, w3_p, b3_p)


def score_model_forward(x, packed, *, tile_n=1024, num_cores=2):
    """x: [N, F] residue features (f32). packed: pack_params(...) output.

    Returns (tr_score[3], rot_score[3])."""
    w1_p, b1_p, w2_p, b2_p, w3_p, b3 = packed
    n, f = x.shape
    f_pad, h_pad = w1_p.shape

    # Large residue tiles (grid-step-overhead bound otherwise), clamped so a
    # small N runs as a single grid step per core.
    eff_tile = min(tile_n, _round_up(n, SUBLANE_BF16))
    steps_single = -(-n // eff_tile)
    cores = num_cores if steps_single >= num_cores else 1
    n_pad = _round_up(n, eff_tile * cores)
    steps_per_core = n_pad // (eff_tile * cores)
    needs_mask = (n_pad != n)

    # Only x is padded / cast per call (row padding + bf16); weights are
    # pre-packed once in pack_params.
    x_p = jnp.zeros((n_pad, f_pad), jnp.bfloat16).at[:n, :f].set(
        x.astype(jnp.bfloat16))

    kernel = functools.partial(
        _score_kernel,
        n_valid=n,
        tile_n=eff_tile,
        steps_per_core=steps_per_core,
        needs_mask=needs_mask,
    )

    partials = pl.pallas_call(
        kernel,
        out_shape=jax.ShapeDtypeStruct((cores, 1, OUT_PAD), jnp.float32),
        grid_spec=pltpu.PrefetchScalarGridSpec(
            num_scalar_prefetch=0,
            grid=(cores, steps_per_core),
            in_specs=[
                # x tile: streaming input, true feature width (full-dim last axis).
                pl.BlockSpec((eff_tile, f_pad),
                             lambda c, i: (c * steps_per_core + i, 0)),
                # Weights / biases resident in VMEM (constant index maps).
                pl.BlockSpec((f_pad, h_pad), lambda c, i: (0, 0)),    # w1
                pl.BlockSpec((1, h_pad), lambda c, i: (0, 0)),        # b1
                pl.BlockSpec((h_pad, h_pad), lambda c, i: (0, 0)),    # w2
                pl.BlockSpec((1, h_pad), lambda c, i: (0, 0)),        # b2
                pl.BlockSpec((h_pad, OUT_PAD), lambda c, i: (0, 0)),  # w3 (f32)
            ],
            out_specs=pl.BlockSpec((1, 1, OUT_PAD), lambda c, i: (c, 0, 0)),
            scratch_shapes=[pltpu.VMEM((1, h_pad), jnp.float32)],
        ),
        compiler_params=pltpu.CompilerParams(
            dimension_semantics=("parallel", "arbitrary")),
    )(x_p, w1_p, b1_p, w2_p, b2_p, w3_p)

    # Combine per-core partial pooled-head projections; apply 1/N and bias once.
    pooled = jnp.sum(partials, axis=0)                     # (1, OUT_PAD)
    score = pooled[:, :OUT_DIM] * (1.0 / n) + b3           # (1, OUT_DIM)
    return score[0, :3], score[0, 3:OUT_DIM]


def init_params(key, feat_dim, hidden_dim):
    k1, k2, k3 = jax.random.split(key, 3)
    scale1 = 1.0 / jnp.sqrt(feat_dim)
    scale2 = 1.0 / jnp.sqrt(hidden_dim)
    w1 = jax.random.normal(k1, (feat_dim, hidden_dim), jnp.float32) * scale1
    b1 = jnp.zeros((1, hidden_dim), jnp.float32)
    w2 = jax.random.normal(k2, (hidden_dim, hidden_dim), jnp.float32) * scale2
    b2 = jnp.zeros((1, hidden_dim), jnp.float32)
    w3 = jax.random.normal(k3, (hidden_dim, OUT_DIM), jnp.float32) * scale2
    b3 = jnp.zeros((1, OUT_DIM), jnp.float32)
    return (w1, b1, w2, b2, w3, b3)


def _reference(x, params):
    """Pure-JAX reference replicating the kernel's bf16/f32 mixed precision."""
    w1, b1, w2, b2, w3, b3 = params
    xb = x.astype(jnp.bfloat16)
    h = jnp.dot(xb, w1.astype(jnp.bfloat16), preferred_element_type=jnp.float32)
    h = jnp.maximum(h + b1, 0.0)
    h = jnp.dot(h.astype(jnp.bfloat16), w2.astype(jnp.bfloat16),
                preferred_element_type=jnp.float32)
    h = jnp.maximum(h + b2, 0.0)
    pooled = jnp.mean(h, axis=0, keepdims=True)            # f32 pool
    out = jnp.dot(pooled, w3, preferred_element_type=jnp.float32) + b3
    return out[0, :3], out[0, 3:OUT_DIM]


if __name__ == "__main__":
    key = jax.random.PRNGKey(0)
    k_x1, k_x2, k_p = jax.random.split(key, 3)

    F = 32    # input feature dim per residue (kept unpadded in the lane dim)
    H = 32    # hidden dim (padded to 128 lanes once, in pack_params)

    params = init_params(k_p, F, H)
    packed = pack_params(params)

    # Case 1: small N -> single grid step, single core, padded rows masked.
    N1 = 200
    x1 = jax.random.normal(k_x1, (N1, F), jnp.float32)
    fwd = jax.jit(score_model_forward)
    tr1, rot1 = fwd(x1, packed)
    jax.block_until_ready((tr1, rot1))
    assert tr1.shape == (3,) and rot1.shape == (3,)
    tr1_ref, rot1_ref = _reference(x1, params)
    assert jnp.allclose(tr1, tr1_ref, rtol=2e-2, atol=2e-2)
    assert jnp.allclose(rot1, rot1_ref, rtol=2e-2, atol=2e-2)

    # Case 2: multi-tile N -> exercises the 2-core split, multi-step reduction
    # and the last-tile row masking path.
    N2 = 600
    x2 = jax.random.normal(k_x2, (N2, F), jnp.float32)
    fwd_small_tiles = jax.jit(functools.partial(score_model_forward, tile_n=256))
    tr2, rot2 = fwd_small_tiles(x2, packed)
    jax.block_until_ready((tr2, rot2))
    tr2_ref, rot2_ref = _reference(x2, params)
    assert jnp.allclose(tr2, tr2_ref, rtol=2e-2, atol=2e-2)
    assert jnp.allclose(rot2, rot2_ref, rtol=2e-2, atol=2e-2)

    print("KERNEL_OK")
</pallas_src>

<mosaic_0001>
module attributes {stable_mosaic.version = 11 : i64} {
  func.func @_score_kernel(%arg0: i32, %arg1: i32, %arg2: memref<208x32xbf16, #tpu.memory_space<vmem>>, %arg3: memref<32x128xbf16, #tpu.memory_space<vmem>>, %arg4: memref<1x128xf32, #tpu.memory_space<vmem>>, %arg5: memref<128x128xbf16, #tpu.memory_space<vmem>>, %arg6: memref<1x128xf32, #tpu.memory_space<vmem>>, %arg7: memref<128x128xf32, #tpu.memory_space<vmem>>, %arg8: memref<1x1x128xf32, #tpu.memory_space<vmem>>, %arg9: memref<1x128xf32, #tpu.memory_space<vmem>>) attributes {dimension_semantics = [#tpu.dimension_semantics<parallel>, #tpu.dimension_semantics<arbitrary>], iteration_bounds = array<i64: 1, 1>, scalar_prefetch = 0 : i64, scratch_operands = 1 : i64, tpu.core_type = #tpu.core_type<tc>, window_params = [{transform_indices = @transform_0, window_bounds = array<i64: 208, 32>}, {pipeline_mode = #tpu.pipeline_mode<synchronous>, transform_indices = @transform_1, window_bounds = array<i64: 32, 128>}, {pipeline_mode = #tpu.pipeline_mode<synchronous>, transform_indices = @transform_2, window_bounds = array<i64: 1, 128>}, {pipeline_mode = #tpu.pipeline_mode<synchronous>, transform_indices = @transform_3, window_bounds = array<i64: 128, 128>}, {pipeline_mode = #tpu.pipeline_mode<synchronous>, transform_indices = @transform_4, window_bounds = array<i64: 1, 128>}, {pipeline_mode = #tpu.pipeline_mode<synchronous>, transform_indices = @transform_5, window_bounds = array<i64: 128, 128>}, {transform_indices = @transform_6, window_bounds = array<i64: 1, 1, 128>}]} {
    %c0_i32 = arith.constant 0 : i32
    %0 = arith.cmpi eq, %arg1, %c0_i32 : i32
    %1 = arith.extui %0 : i1 to i32
    %c0_i32_0 = arith.constant 0 : i32
    %2 = arith.cmpi ne, %1, %c0_i32_0 : i32
    scf.if %2 {
      %cst_18 = arith.constant 0.000000e+00 : f32
      %32 = vector.broadcast %cst_18 : f32 to vector<1x128xf32>
      %c0_19 = arith.constant 0 : index
      %c0_20 = arith.constant 0 : index
      %33 = vector.load %arg9[%c0_19, %c0_20] : memref<1x128xf32, #tpu.memory_space<vmem>>, vector<1x128xf32>
      tpu.vector_store %arg9[%c0_19, %c0_20], %32 {strides = array<i32>} : memref<1x128xf32, #tpu.memory_space<vmem>>, vector<1x128xf32>,
    } else {
    }
    %c0 = arith.constant 0 : index
    %c0_1 = arith.constant 0 : index
    %3 = vector.load %arg2[%c0, %c0_1] : memref<208x32xbf16, #tpu.memory_space<vmem>>, vector<208x32xbf16>
    %c0_2 = arith.constant 0 : index
    %c0_3 = arith.constant 0 : index
    %4 = vector.load %arg3[%c0_2, %c0_3] : memref<32x128xbf16, #tpu.memory_space<vmem>>, vector<32x128xbf16>
    %cst = arith.constant dense<0.000000e+00> : vector<208x128xf32>
    %5 = tpu.matmul %3, %4, %cst {dimension_numbers = #tpu.dot_dimension_numbers<[1], [0], [0], [1], [0, 0, 1, 1], [], []>} : vector<208x32xbf16>, vector<32x128xbf16>, vector<208x128xf32> -> vector<208x128xf32>
    %c0_4 = arith.constant 0 : index
    %c0_5 = arith.constant 0 : index
    %6 = vector.load %arg4[%c0_4, %c0_5] : memref<1x128xf32, #tpu.memory_space<vmem>>, vector<1x128xf32>
    %7 = vector.broadcast %6 : vector<1x128xf32> to vector<208x128xf32>
    %8 = arith.addf %5, %7 : vector<208x128xf32>
    %cst_6 = arith.constant 0.000000e+00 : f32
    %9 = vector.broadcast %cst_6 : f32 to vector<208x128xf32>
    %10 = arith.maximumf %8, %9 : vector<208x128xf32>
    %11 = arith.truncf %10 : vector<208x128xf32> to vector<208x128xbf16>
    %c0_7 = arith.constant 0 : index
    %c0_8 = arith.constant 0 : index
    %12 = vector.load %arg5[%c0_7, %c0_8] : memref<128x128xbf16, #tpu.memory_space<vmem>>, vector<128x128xbf16>
    %cst_9 = arith.constant dense<0.000000e+00> : vector<208x128xf32>
    %13 = tpu.matmul %11, %12, %cst_9 {dimension_numbers = #tpu.dot_dimension_numbers<[1], [0], [0], [1], [0, 0, 1, 1], [], []>} : vector<208x128xbf16>, vector<128x128xbf16>, vector<208x128xf32> -> vector<208x128xf32>
    %c0_10 = arith.constant 0 : index
    %c0_11 = arith.constant 0 : index
    %14 = vector.load %arg6[%c0_10, %c0_11] : memref<1x128xf32, #tpu.memory_space<vmem>>, vector<1x128xf32>
    %15 = vector.broadcast %14 : vector<1x128xf32> to vector<208x128xf32>
    %16 = arith.addf %13, %15 : vector<208x128xf32>
    %cst_12 = arith.constant 0.000000e+00 : f32
    %17 = vector.broadcast %cst_12 : f32 to vector<208x128xf32>
    %18 = arith.maximumf %16, %17 : vector<208x128xf32>
    %c1_i32 = arith.constant 1 : i32
    %19 = arith.muli %arg0, %c1_i32 : i32
    %20 = arith.addi %19, %arg1 : i32
    %c208_i32 = arith.constant 208 : i32
    %21 = arith.muli %20, %c208_i32 : i32
    %c208_i32_13 = arith.constant 208 : i32
    %22 = arith.addi %21, %c208_i32_13 : i32
    %c200_i32 = arith.constant 200 : i32
    %23 = arith.cmpi sgt, %22, %c200_i32 : i32
    %24 = arith.extui %23 : i1 to i32
    %c0_i32_14 = arith.constant 0 : i32
    %25 = arith.cmpi ne, %24, %c0_i32_14 : i32
    scf.if %25 {
      %32 = tpu.iota {dimensions = array<i32: 0>} : vector<208x1xi32>
      %33 = vector.broadcast %21 : i32 to vector<208x1xi32>
      %34 = arith.addi %33, %32 : vector<208x1xi32>
      %c0_18 = arith.constant 0 : index
      %c0_19 = arith.constant 0 : index
      %35 = vector.load %arg9[%c0_18, %c0_19] : memref<1x128xf32, #tpu.memory_space<vmem>>, vector<1x128xf32>
      %c200_i32_20 = arith.constant 200 : i32
      %36 = vector.broadcast %c200_i32_20 : i32 to vector<208x1xi32>
      %37 = arith.cmpi slt, %34, %36 : vector<208x1xi32>
      %cst_21 = arith.constant 0.000000e+00 : f32
      %38 = vector.shape_cast %37 : vector<208x1xi1> to vector<208x1xi1>
      %39 = vector.broadcast %38 : vector<208x1xi1> to vector<208x128xi1>
      %40 = vector.broadcast %cst_21 : f32 to vector<208x128xf32>
      %41 = arith.select %39, %18, %40 : vector<208x128xi1>, vector<208x128xf32>
      %cst_22 = arith.constant dense<0.000000e+00> : vector<128xf32>
      %42 = vector.multi_reduction <add>, %41, %cst_22 [0] : vector<208x128xf32> to vector<128xf32>
      %43 = vector.shape_cast %42 : vector<128xf32> to vector<1x128xf32>
      %44 = arith.addf %35, %43 : vector<1x128xf32>
      %c0_23 = arith.constant 0 : index
      %c0_24 = arith.constant 0 : index
      %45 = vector.load %arg9[%c0_23, %c0_24] : memref<1x128xf32, #tpu.memory_space<vmem>>, vector<1x128xf32>
      tpu.vector_store %arg9[%c0_23, %c0_24], %44 {strides = array<i32>} : memref<1x128xf32, #tpu.memory_space<vmem>>, vector<1x128xf32>,
    } else {
    }
    %true = arith.constant true
    %26 = arith.xori %23, %true : i1
    %27 = arith.extui %26 : i1 to i32
    %c0_i32_15 = arith.constant 0 : i32
    %28 = arith.cmpi ne, %27, %c0_i32_15 : i32
    scf.if %28 {
      %c0_18 = arith.constant 0 : index
      %c0_19 = arith.constant 0 : index
      %32 = vector.load %arg9[%c0_18, %c0_19] : memref<1x128xf32, #tpu.memory_space<vmem>>, vector<1x128xf32>
      %cst_20 = arith.constant dense<0.000000e+00> : vector<128xf32>
      %33 = vector.multi_reduction <add>, %18, %cst_20 [0] : vector<208x128xf32> to vector<128xf32>
      %34 = vector.shape_cast %33 : vector<128xf32> to vector<1x128xf32>
      %35 = arith.addf %32, %34 : vector<1x128xf32>
      %c0_21 = arith.constant 0 : index
      %c0_22 = arith.constant 0 : index
      %36 = vector.load %arg9[%c0_21, %c0_22] : memref<1x128xf32, #tpu.memory_space<vmem>>, vector<1x128xf32>
      tpu.vector_store %arg9[%c0_21, %c0_22], %35 {strides = array<i32>} : memref<1x128xf32, #tpu.memory_space<vmem>>, vector<1x128xf32>,
    } else {
    }
    %c0_i32_16 = arith.constant 0 : i32
    %29 = arith.cmpi eq, %arg1, %c0_i32_16 : i32
    %30 = arith.extui %29 : i1 to i32
    %c0_i32_17 = arith.constant 0 : i32
    %31 = arith.cmpi ne, %30, %c0_i32_17 : i32
    scf.if %31 {
      %c0_18 = arith.constant 0 : index
      %c0_19 = arith.constant 0 : index
      %32 = vector.load %arg9[%c0_18, %c0_19] : memref<1x128xf32, #tpu.memory_space<vmem>>, vector<1x128xf32>
      %c0_20 = arith.constant 0 : index
      %c0_21 = arith.constant 0 : index
      %33 = vector.load %arg7[%c0_20, %c0_21] : memref<128x128xf32, #tpu.memory_space<vmem>>, vector<128x128xf32>
      %cst_22 = arith.constant dense<0.000000e+00> : vector<1x128xf32>
      %34 = tpu.matmul %32, %33, %cst_22 {dimension_numbers = #tpu.dot_dimension_numbers<[1], [0], [0], [1], [0, 0, 1, 1], [], []>} : vector<1x128xf32>, vector<128x128xf32>, vector<1x128xf32> -> vector<1x128xf32>
      %c0_23 = arith.constant 0 : index
      %c0_24 = arith.constant 0 : index
      %c0_25 = arith.constant 0 : index
      %35 = vector.load %arg8[%c0_23, %c0_24, %c0_25] : memref<1x1x128xf32, #tpu.memory_space<vmem>>, vector<1x1x128xf32>
      %36 = vector.shape_cast %35 : vector<1x1x128xf32> to vector<1x128xf32>
      %37 = vector.shape_cast %34 : vector<1x128xf32> to vector<1x1x128xf32>
      tpu.vector_store %arg8[%c0_23, %c0_24, %c0_25], %37 {strides = array<i32>} : memref<1x1x128xf32, #tpu.memory_space<vmem>>, vector<1x1x128xf32>,
    } else {
    }
    return
  }
  func.func @transform_0(%arg0: i32, %arg1: i32) -> (i32, i32) {
    %c1_i32 = arith.constant 1 : i32
    %0 = arith.muli %arg0, %c1_i32 : i32
    %1 = arith.addi %0, %arg1 : i32
    %c0_i32 = arith.constant 0 : i32
    %c0_i32_0 = arith.constant 0 : i32
    return %1, %c0_i32 : i32, i32
  }
  func.func @transform_1(%arg0: i32, %arg1: i32) -> (i32, i32) {
    %c0_i32 = arith.constant 0 : i32
    %c0_i32_0 = arith.constant 0 : i32
    %c0_i32_1 = arith.constant 0 : i32
    return %c0_i32, %c0_i32_0 : i32, i32
  }
  func.func @transform_2(%arg0: i32, %arg1: i32) -> (i32, i32) {
    %c0_i32 = arith.constant 0 : i32
    %c0_i32_0 = arith.constant 0 : i32
    %c0_i32_1 = arith.constant 0 : i32
    return %c0_i32, %c0_i32_0 : i32, i32
  }
  func.func @transform_3(%arg0: i32, %arg1: i32) -> (i32, i32) {
    %c0_i32 = arith.constant 0 : i32
    %c0_i32_0 = arith.constant 0 : i32
    %c0_i32_1 = arith.constant 0 : i32
    return %c0_i32, %c0_i32_0 : i32, i32
  }
  func.func @transform_4(%arg0: i32, %arg1: i32) -> (i32, i32) {
    %c0_i32 = arith.constant 0 : i32
    %c0_i32_0 = arith.constant 0 : i32
    %c0_i32_1 = arith.constant 0 : i32
    return %c0_i32, %c0_i32_0 : i32, i32
  }
  func.func @transform_5(%arg0: i32, %arg1: i32) -> (i32, i32) {
    %c0_i32 = arith.constant 0 : i32
    %c0_i32_0 = arith.constant 0 : i32
    %c0_i32_1 = arith.constant 0 : i32
    return %c0_i32, %c0_i32_0 : i32, i32
  }
  func.func @transform_6(%arg0: i32, %arg1: i32) -> (i32, i32, i32) {
    %c0_i32 = arith.constant 0 : i32
    %c0_i32_0 = arith.constant 0 : i32
    %c0_i32_1 = arith.constant 0 : i32
    return %arg0, %c0_i32, %c0_i32_0 : i32, i32, i32
  }
}

</mosaic_0001>

<llo_original>
// kernel: score_model_forward.1
$region0: #{score_model_forward.1}
  #allocation0 [shape = 'u32[]', space=smem, size = 0x4, offset = 0x4, fixed_abs, tag = 'smem constant byte address 0x4 - core index']
  #allocation1 [shape = 'u32[144,128]{1,0:T(1,128)}', space=vmem, size = 0x12000, scoped, tag = 'internal scratch']
  #allocation2 [shape = 'f32[1,128]{1,0:T(1,128)}', space=vmem, size = 0x200, scoped, tag = 'scratch operand']
  %s0 = inlined_call_operand.vmem [shape: bf16[208,32], index: 0, kind: input, shape index: {}]
  %s1 = inlined_call_operand.vmem [shape: bf16[32,128], index: 1, kind: input, shape index: {}]
  %s2 = inlined_call_operand.vmem [shape: f32[1,128], index: 2, kind: input, shape index: {}]
  %s3 = inlined_call_operand.vmem [shape: bf16[128,128], index: 3, kind: input, shape index: {}]
  %s4 = inlined_call_operand.vmem [shape: f32[1,128], index: 4, kind: input, shape index: {}]
  %s5 = inlined_call_operand.vmem [shape: f32[128,128], index: 5, kind: input, shape index: {}]
  %s6 = inlined_call_operand.vmem [shape: f32[1,1,128], index: 6, kind: output, shape index: {}]
  %s7 = sld [smem:[#allocation0]]
  $region50: #{score_model_forward.1} parent=0
    _
  %s9 = ssub.s32 1, %s7
  %s10 = scalar_select 0, %s9, %s7
  // Predicated region
  $region2: #{score_model_forward.1} parent=0 // pred_check
    _
  $region3: #{score_model_forward.1} parent=0 // pred_check_branch
    %12 = sbr.rel (0) target = $region5
  $region4: #{score_model_forward.1} parent=0 // pred_region
    %s13 = sadd.s32 0, 0
    %s14 = smul.u32 26, %s13
    %p15 = scmp.lt.s32.totalorder %s14, 25
    %s16 = scalar_select %p15, %s14, 25
    %s17 = smul.addr %s16, 4
    %s18 = scalar_lea.vmem %s0, %s17
    %s19 = sadd.s32 0, 0
    %s20 = smul.u32 26, %s19
  $region5: #{score_model_forward.1} parent=0 // pred_fallthru
    _
  // Predicated region
  $region6: #{score_model_forward.1} parent=0 // pred_check
    _
  $region7: #{score_model_forward.1} parent=0 // pred_check_branch
    %22 = sbr.rel (0) target = $region9
  $region8: #{score_model_forward.1} parent=0 // pred_region
    _
  $region9: #{score_model_forward.1} parent=0 // pred_fallthru
    _
  // Predicated region
  $region10: #{score_model_forward.1} parent=0 // pred_check
    _
  $region11: #{score_model_forward.1} parent=0 // pred_check_branch
    %24 = sbr.rel (0) target = $region13
  $region12: #{score_model_forward.1} parent=0 // pred_region
    _
  $region13: #{score_model_forward.1} parent=0 // pred_fallthru
    _
  // Predicated region
  $region14: #{score_model_forward.1} parent=0 // pred_check
    _
  $region15: #{score_model_forward.1} parent=0 // pred_check_branch
    %26 = sbr.rel (0) target = $region17
  $region16: #{score_model_forward.1} parent=0 // pred_region
    _
  $region17: #{score_model_forward.1} parent=0 // pred_fallthru
    _
  // Predicated region
  $region18: #{score_model_forward.1} parent=0 // pred_check
    _
  $region19: #{score_model_forward.1} parent=0 // pred_check_branch
    %28 = sbr.rel (0) target = $region21
  $region20: #{score_model_forward.1} parent=0 // pred_region
    _
  $region21: #{score_model_forward.1} parent=0 // pred_fallthru
    _
  // Predicated region
  $region22: #{score_model_forward.1} parent=0 // pred_check
    _
  $region23: #{score_model_forward.1} parent=0 // pred_check_branch
    %30 = sbr.rel (0) target = $region25
  $region24: #{score_model_forward.1} parent=0 // pred_region
    _
  $region25: #{score_model_forward.1} parent=0 // pred_fallthru
    _
  %s31 = sadd.s32 0, 0
  %s32 = smul.u32 26, %s31
  %p33 = scmp.lt.s32.totalorder %s32, 25
  %s34 = scalar_select %p33, %s32, 25
  %s35 = smul.addr %s34, 4
  %s36 = scalar_lea.vmem %s0, %s35
  %s37 = sadd.s32 0, 0
  %s38 = smul.u32 26, %s37
  %p39 = scmp.lt.s32.totalorder %s38, 25
  %s40 = scalar_select %p39, %s38, 25
  %s41 = smul.addr %s40, 4
  %s42 = scalar_lea.vmem %s0, %s41
  %s43 = sadd.s32 0, 0
  %s44 = smul.u32 26, %s43
  %p46 = scmp.eq.s32.totalorder 0, 0
  // Predicated region
  $region26: #{score_model_forward.1} parent=0 // pred_check
    %p47 = pneg %p46
  $region27: #{score_model_forward.1} parent=0 // pred_check_branch
    %49 = sbr.rel (%p47) target = $region29
  $region28: #{score_model_forward.1} parent=0 // pred_region
    %50 = vst [vmem:[#allocation2] sm:$0x1] 0.0
  $region29: #{score_model_forward.1} parent=0 // pred_fallthru
    _
  %v51 = vld [vmem:[%s42] sm:$0xf]
  %v52 = vld [vmem:[%s42 + $0x4] sm:$0xf]
  %v53 = vld [vmem:[%s42 + $0x8] sm:$0xf]
  %v54 = vld [vmem:[%s42 + $0xc] sm:$0xf]
  %v55 = vld [vmem:[%s42 + $0x10] sm:$0xf]
  %v56 = vld [vmem:[%s42 + $0x14] sm:$0xf]
  %v57 = vld [vmem:[%s42 + $0x18] sm:$0xf]
  %v58 = vld [vmem:[%s42 + $0x1c] sm:$0xf]
  %v59 = vld [vmem:[%s42 + $0x20] sm:$0xf]
  %v60 = vld [vmem:[%s42 + $0x24] sm:$0xf]
  %v61 = vld [vmem:[%s42 + $0x28] sm:$0xf]
  %v62 = vld [vmem:[%s42 + $0x2c] sm:$0xf]
  %v63 = vld [vmem:[%s42 + $0x30] sm:$0xf]
  %v64 = vld [vmem:[%s42 + $0x34] sm:$0xf]
  %v65 = vld [vmem:[%s42 + $0x38] sm:$0xf]
  %v66 = vld [vmem:[%s42 + $0x3c] sm:$0xf]
  %v67 = vld [vmem:[%s42 + $0x40] sm:$0xf]
  %v68 = vld [vmem:[%s42 + $0x44] sm:$0xf]
  %v69 = vld [vmem:[%s42 + $0x48] sm:$0xf]
  %v70 = vld [vmem:[%s42 + $0x4c] sm:$0xf]
  %v71 = vld [vmem:[%s42 + $0x50] sm:$0xf]
  %v72 = vld [vmem:[%s42 + $0x54] sm:$0xf]
  %v73 = vld [vmem:[%s42 + $0x58] sm:$0xf]
  %v74 = vld [vmem:[%s42 + $0x5c] sm:$0xf]
  %v75 = vld [vmem:[%s42 + $0x60] sm:$0xf]
  %v76 = vld [vmem:[%s42 + $0x64] sm:$0xf]
  %v77 = vld [vmem:[%s1] sm:$0xf]
  %v78 = vld [vmem:[%s1 + $0x4] sm:$0xf]
  %v79 = vld [vmem:[%s1 + $0x8] sm:$0xf]
  %v80 = vld [vmem:[%s1 + $0xc] sm:$0xf]
  %v81 = vld [vmem:[%s2] sm:$0x1]
  %v83 = vlaneseq
  %v84 = vshrl.u32 %v83, 7
  %v85 = vsub.s32 0, %v84
  %v86 = vrot.slane %v81, %v85
  %v114 = vunpack.c.l.b16 %v51
  %v115 = vunpack.c.l.b16 %v52
  %v116 = vunpack.c.l.b16 %v53
  %v117 = vunpack.c.l.b16 %v54
  %v118 = vunpack.c.l.b16 %v55
  %v119 = vunpack.c.l.b16 %v56
  %v120 = vunpack.c.l.b16 %v57
  %v121 = vunpack.c.l.b16 %v58
  %v122 = vunpack.c.l.b16 %v59
  %v123 = vunpack.c.l.b16 %v60
  %v124 = vunpack.c.l.b16 %v61
  %v125 = vunpack.c.l.b16 %v62
  %v126 = vunpack.c.l.b16 %v63
  %v127 = vunpack.c.l.b16 %v64
  %v128 = vunpack.c.l.b16 %v65
  %v129 = vunpack.c.l.b16 %v66
  %v130 = vunpack.c.l.b16 %v67
  %v131 = vunpack.c.l.b16 %v68
  %v132 = vunpack.c.l.b16 %v69
  %v133 = vunpack.c.l.b16 %v70
  %v134 = vunpack.c.l.b16 %v71
  %v135 = vunpack.c.l.b16 %v72
  %v136 = vunpack.c.l.b16 %v73
  %v137 = vunpack.c.l.b16 %v74
  %v138 = vunpack.c.l.b16 %v75
  %v139 = vunpack.c.l.b16 %v76
  %v140 = vpack.c.b16 %v115, %v114
  %v141 = vpack.c.b16 %v117, %v116
  %v142 = vpack.c.b16 %v119, %v118
  %v143 = vpack.c.b16 %v121, %v120
  %v144 = vpack.c.b16 %v123, %v122
  %v145 = vpack.c.b16 %v125, %v124
  %v146 = vpack.c.b16 %v127, %v126
  %v147 = vpack.c.b16 %v129, %v128
  %v148 = vpack.c.b16 %v131, %v130
  %v149 = vpack.c.b16 %v133, %v132
  %v150 = vpack.c.b16 %v135, %v134
  %v151 = vpack.c.b16 %v137, %v136
  %v152 = vpack.c.b16 %v139, %v138
  %v157 = vunpack.c.l.b16 %v77
  %v158 = vunpack.c.l.b16 %v78
  %v159 = vunpack.c.l.b16 %v79
  %v160 = vunpack.c.l.b16 %v80
  %v161 = vpack.c.b16 %v158, %v157
  %v162 = vpack.c.b16 %v160, %v159
  %vm165 = vcmask 261120
  %v167 = vsel %vm165, %v140, 0
  %v170 = vsel %vm165, %v141, 0
  %v173 = vsel %vm165, %v142, 0
  %v176 = vsel %vm165, %v143, 0
  %v179 = vsel %vm165, %v144, 0
  %v182 = vsel %vm165, %v145, 0
  %v185 = vsel %vm165, %v146, 0
  %v188 = vsel %vm165, %v147, 0
  %v191 = vsel %vm165, %v148, 0
  %v194 = vsel %vm165, %v149, 0
  %v197 = vsel %vm165, %v150, 0
  %v200 = vsel %vm165, %v151, 0
  %v203 = vsel %vm165, %v152, 0
  %205 = vmatprep.subr.bf16.mxu0 0
  %206 = vmatpush1.bf16.msra.mxu0 %v161
  %207 = vmatprep.subr.bf16.mxu0 0
  %208 = vmatpush1.bf16.msra.mxu0 %v162
  %209 = vmatprep.subr.bf16.mxu0 0
  %210 = vmatpush1.bf16.msra.mxu0 0
  %211 = vmatprep.subr.bf16.mxu0 0
  %212 = vmatpush1.bf16.msra.mxu0 0
  %213 = vmatprep.subr.bf16.mxu0 0
  %214 = vmatpush1.bf16.msra.mxu0 0
  %215 = vmatprep.subr.bf16.mxu0 0
  %216 = vmatpush1.bf16.msra.mxu0 0
  %217 = vmatprep.subr.bf16.mxu0 0
  %218 = vmatpush1.bf16.msra.mxu0 0
  %219 = vmatprep.subr.bf16.mxu0 0
  %220 = vmatpush1.bf16.msra.mxu0 0
  %221 = vmatprep.subr.bf16.mxu0 0
  %222 = vmatpush1.bf16.msra.mxu0 0
  %223 = vmatprep.subr.bf16.mxu0 0
  %224 = vmatpush1.bf16.msra.mxu0 0
  %225 = vmatprep.subr.bf16.mxu0 0
  %226 = vmatpush1.bf16.msra.mxu0 0
  %227 = vmatprep.subr.bf16.mxu0 0
  %228 = vmatpush1.bf16.msra.mxu0 0
  %229 = vmatprep.subr.bf16.mxu0 0
  %230 = vmatpush1.bf16.msra.mxu0 0
  %231 = vmatprep.subr.bf16.mxu0 0
  %232 = vmatpush1.bf16.msra.mxu0 0
  %233 = vmatprep.subr.bf16.mxu0 0
  %234 = vmatpush1.bf16.msra.mxu0 0
  %235 = vmatprep.subr.bf16.mxu0 0
  %236 = vmatpush1.bf16.msra.mxu0 0
  %237 = vmatprep.mubr.bf16.mxu0 0
  %238 = vmatmul.mubr.bf16.gmra.mrb[0].mxu0 %v167
  %v239 = vpop.f32.mrb[0].mxu0
  %v240 = vadd.f32 %v86, %v239
  %v241 = vpop.f32.mrb[0].mxu0
  %v242 = vpop.f32.mrb[0].mxu0
  %v243 = vadd.f32 %v86, %v242
  %v244 = vpop.f32.mrb[0].mxu0
  %245 = vmatprep.mubr.bf16.mxu0 0
  %246 = vmatmul.mubr.bf16.gmra.mrb[0].mxu0 %v170
  %v247 = vpop.f32.mrb[0].mxu0
  %v248 = vadd.f32 %v86, %v247
  %v249 = vpop.f32.mrb[0].mxu0
  %v250 = vpop.f32.mrb[0].mxu0
  %v251 = vadd.f32 %v86, %v250
  %v252 = vpop.f32.mrb[0].mxu0
  %253 = vmatprep.mubr.bf16.mxu0 0
  %254 = vmatmul.mubr.bf16.gmra.mrb[0].mxu0 %v173
  %v255 = vpop.f32.mrb[0].mxu0
  %v256 = vadd.f32 %v86, %v255
  %v257 = vpop.f32.mrb[0].mxu0
  %v258 = vpop.f32.mrb[0].mxu0
  %v259 = vadd.f32 %v86, %v258
  %v260 = vpop.f32.mrb[0].mxu0
  %261 = vmatprep.mubr.bf16.mxu0 0
  %262 = vmatmul.mubr.bf16.gmra.mrb[0].mxu0 %v176
  %v263 = vpop.f32.mrb[0].mxu0
  %v264 = vadd.f32 %v86, %v263
  %v265 = vpop.f32.mrb[0].mxu0
  %v266 = vpop.f32.mrb[0].mxu0
  %v267 = vadd.f32 %v86, %v266
  %v268 = vpop.f32.mrb[0].mxu0
  %269 = vmatprep.mubr.bf16.mxu0 0
  %270 = vmatmul.mubr.bf16.gmra.mrb[0].mxu0 %v179
  %v271 = vpop.f32.mrb[0].mxu0
  %v272 = vadd.f32 %v86, %v271
  %v273 = vpop.f32.mrb[0].mxu0
  %v274 = vpop.f32.mrb[0].mxu0
  %v275 = vadd.f32 %v86, %v274
  %v276 = vpop.f32.mrb[0].mxu0
  %277 = vmatprep.mubr.bf16.mxu0 0
  %278 = vmatmul.mubr.bf16.gmra.mrb[0].mxu0 %v182
  %v279 = vpop.f32.mrb[0].mxu0
  %v280 = vadd.f32 %v86, %v279
  %v281 = vpop.f32.mrb[0].mxu0
  %v282 = vpop.f32.mrb[0].mxu0
  %v283 = vadd.f32 %v86, %v282
  %v284 = vpop.f32.mrb[0].mxu0
  %285 = vmatprep.mubr.bf16.mxu0 0
  %286 = vmatmul.mubr.bf16.gmra.mrb[0].mxu0 %v185
  %v287 = vpop.f32.mrb[0].mxu0
  %v288 = vadd.f32 %v86, %v287
  %v289 = vpop.f32.mrb[0].mxu0
  %v290 = vpop.f32.mrb[0].mxu0
  %v291 = vadd.f32 %v86, %v290
  %v292 = vpop.f32.mrb[0].mxu0
  %293 = vmatprep.mubr.bf16.mxu0 0
  %294 = vmatmul.mubr.bf16.gmra.mrb[0].mxu0 %v188
  %v295 = vpop.f32.mrb[0].mxu0
  %v296 = vadd.f32 %v86, %v295
  %v297 = vpop.f32.mrb[0].mxu0
  %v298 = vpop.f32.mrb[0].mxu0
  %v299 = vadd.f32 %v86, %v298
  %v300 = vpop.f32.mrb[0].mxu0
  %301 = vmatprep.mubr.bf16.mxu0 0
  %302 = vmatmul.mubr.bf16.gmra.mrb[0].mxu0 %v191
  %v303 = vpop.f32.mrb[0].mxu0
  %v304 = vadd.f32 %v86, %v303
  %v305 = vpop.f32.mrb[0].mxu0
  %v306 = vpop.f32.mrb[0].mxu0
  %v307 = vadd.f32 %v86, %v306
  %v308 = vpop.f32.mrb[0].mxu0
  %309 = vmatprep.mubr.bf16.mxu0 0
  %310 = vmatmul.mubr.bf16.gmra.mrb[0].mxu0 %v194
  %v311 = vpop.f32.mrb[0].mxu0
  %v312 = vadd.f32 %v86, %v311
  %v313 = vpop.f32.mrb[0].mxu0
  %v314 = vpop.f32.mrb[0].mxu0
  %v315 = vadd.f32 %v86, %v314
  %v316 = vpop.f32.mrb[0].mxu0
  %317 = vmatprep.mubr.bf16.mxu0 0
  %318 = vmatmul.mubr.bf16.gmra.mrb[0].mxu0 %v197
  %v319 = vpop.f32.mrb[0].mxu0
  %v320 = vadd.f32 %v86, %v319
  %v321 = vpop.f32.mrb[0].mxu0
  %v322 = vpop.f32.mrb[0].mxu0
  %v323 = vadd.f32 %v86, %v322
  %v324 = vpop.f32.mrb[0].mxu0
  %325 = vmatprep.mubr.bf16.mxu0 0
  %326 = vmatmul.mubr.bf16.gmra.mrb[0].mxu0 %v200
  %v327 = vpop.f32.mrb[0].mxu0
  %v328 = vadd.f32 %v86, %v327
  %v329 = vpop.f32.mrb[0].mxu0
  %v330 = vpop.f32.mrb[0].mxu0
  %v331 = vadd.f32 %v86, %v330
  %v332 = vpop.f32.mrb[0].mxu0
  %333 = vmatprep.mubr.bf16.mxu0 0
  %334 = vmatmul.mubr.bf16.gmra.mrb[0].mxu0 %v203
  %v335 = vpop.f32.mrb[0].mxu0
  %v336 = vadd.f32 %v86, %v335
  %v337 = vpop.f32.mrb[0].mxu0
  %v338 = vpop.f32.mrb[0].mxu0
  %v339 = vadd.f32 %v86, %v338
  %v340 = vpop.f32.mrb[0].mxu0
  %341 = vdwg.mxu0
  %v342 = vmax.f32 %v240, 0.0
  %v343 = vmax.f32 %v243, 0.0
  %v344 = vmax.f32 %v248, 0.0
  %v345 = vmax.f32 %v251, 0.0
  %v346 = vmax.f32 %v256, 0.0
  %v347 = vmax.f32 %v259, 0.0
  %v348 = vmax.f32 %v264, 0.0
  %v349 = vmax.f32 %v267, 0.0
  %v350 = vmax.f32 %v272, 0.0
  %v351 = vmax.f32 %v275, 0.0
  %v352 = vmax.f32 %v280, 0.0
  %v353 = vmax.f32 %v283, 0.0
  %v354 = vmax.f32 %v288, 0.0
  %v355 = vmax.f32 %v291, 0.0
  %v356 = vmax.f32 %v296, 0.0
  %v357 = vmax.f32 %v299, 0.0
  %v358 = vmax.f32 %v304, 0.0
  %v359 = vmax.f32 %v307, 0.0
  %v360 = vmax.f32 %v312, 0.0
  %v361 = vmax.f32 %v315, 0.0
  %v362 = vmax.f32 %v320, 0.0
  %v363 = vmax.f32 %v323, 0.0
  %v364 = vmax.f32 %v328, 0.0
  %v365 = vmax.f32 %v331, 0.0
  %v366 = vmax.f32 %v336, 0.0
  %v367 = vmax.f32 %v339, 0.0
  %v368 = vpack.c.bf16 %v343, %v342
  %v369 = vpack.c.bf16 %v345, %v344
  %v370 = vpack.c.bf16 %v347, %v346
  %v371 = vpack.c.bf16 %v349, %v348
  %v372 = vpack.c.bf16 %v351, %v350
  %v373 = vpack.c.bf16 %v353, %v352
  %v374 = vpack.c.bf16 %v355, %v354
  %v375 = vpack.c.bf16 %v357, %v356
  %v376 = vpack.c.bf16 %v359, %v358
  %v377 = vpack.c.bf16 %v361, %v360
  %v378 = vpack.c.bf16 %v363, %v362
  %v379 = vpack.c.bf16 %v365, %v364
  %v380 = vpack.c.bf16 %v367, %v366
  %v381 = vld [vmem:[%s3] sm:$0xf]
  %v382 = vld [vmem:[%s3 + $0x4] sm:$0xf]
  %v383 = vld [vmem:[%s3 + $0x8] sm:$0xf]
  %v384 = vld [vmem:[%s3 + $0xc] sm:$0xf]
  %v385 = vld [vmem:[%s3 + $0x10] sm:$0xf]
  %v386 = vld [vmem:[%s3 + $0x14] sm:$0xf]
  %v387 = vld [vmem:[%s3 + $0x18] sm:$0xf]
  %v388 = vld [vmem:[%s3 + $0x1c] sm:$0xf]
  %v389 = vld [vmem:[%s3 + $0x20] sm:$0xf]
  %v390 = vld [vmem:[%s3 + $0x24] sm:$0xf]
  %v391 = vld [vmem:[%s3 + $0x28] sm:$0xf]
  %v392 = vld [vmem:[%s3 + $0x2c] sm:$0xf]
  %v393 = vld [vmem:[%s3 + $0x30] sm:$0xf]
  %v394 = vld [vmem:[%s3 + $0x34] sm:$0xf]
  %v395 = vld [vmem:[%s3 + $0x38] sm:$0xf]
  %v396 = vld [vmem:[%s3 + $0x3c] sm:$0xf]
  %v397 = vld [vmem:[%s4] sm:$0x1]
  %v399 = vlaneseq
  %v400 = vshrl.u32 %v399, 7
  %v401 = vsub.s32 0, %v400
  %v402 = vrot.slane %v397, %v401
  %v420 = vunpack.c.l.b16 %v381
  %v421 = vunpack.c.l.b16 %v382
  %v422 = vunpack.c.l.b16 %v383
  %v423 = vunpack.c.l.b16 %v384
  %v424 = vunpack.c.l.b16 %v385
  %v425 = vunpack.c.l.b16 %v386
  %v426 = vunpack.c.l.b16 %v387
  %v427 = vunpack.c.l.b16 %v388
  %v428 = vunpack.c.l.b16 %v389
  %v429 = vunpack.c.l.b16 %v390
  %v430 = vunpack.c.l.b16 %v391
  %v431 = vunpack.c.l.b16 %v392
  %v432 = vunpack.c.l.b16 %v393
  %v433 = vunpack.c.l.b16 %v394
  %v434 = vunpack.c.l.b16 %v395
  %v435 = vunpack.c.l.b16 %v396
  %v436 = vpack.c.b16 %v421, %v420
  %v437 = vpack.c.b16 %v423, %v422
  %v438 = vpack.c.b16 %v425, %v424
  %v439 = vpack.c.b16 %v427, %v426
  %v440 = vpack.c.b16 %v429, %v428
  %v441 = vpack.c.b16 %v431, %v430
  %v442 = vpack.c.b16 %v433, %v432
  %v443 = vpack.c.b16 %v435, %v434
  %452 = vmatprep.subr.bf16.mxu0 0
  %453 = vmatpush1.bf16.msra.mxu0 %v436
  %454 = vmatprep.subr.bf16.mxu0 0
  %455 = vmatpush1.bf16.msra.mxu0 %v437
  %456 = vmatprep.subr.bf16.mxu0 0
  %457 = vmatpush1.bf16.msra.mxu0 %v438
  %458 = vmatprep.subr.bf16.mxu0 0
  %459 = vmatpush1.bf16.msra.mxu0 %v439
  %460 = vmatprep.subr.bf16.mxu0 0
  %461 = vmatpush1.bf16.msra.mxu0 %v440
  %462 = vmatprep.subr.bf16.mxu0 0
  %463 = vmatpush1.bf16.msra.mxu0 %v441
  %464 = vmatprep.subr.bf16.mxu0 0
  %465 = vmatpush1.bf16.msra.mxu0 %v442
  %466 = vmatprep.subr.bf16.mxu0 0
  %467 = vmatpush1.bf16.msra.mxu0 %v443
  %468 = vmatprep.subr.bf16.mxu0 0
  %469 = vmatpush1.bf16.msra.mxu0 0
  %470 = vmatprep.subr.bf16.mxu0 0
  %471 = vmatpush1.bf16.msra.mxu0 0
  %472 = vmatprep.subr.bf16.mxu0 0
  %473 = vmatpush1.bf16.msra.mxu0 0
  %474 = vmatprep.subr.bf16.mxu0 0
  %475 = vmatpush1.bf16.msra.mxu0 0
  %476 = vmatprep.subr.bf16.mxu0 0
  %477 = vmatpush1.bf16.msra.mxu0 0
  %478 = vmatprep.subr.bf16.mxu0 0
  %479 = vmatpush1.bf16.msra.mxu0 0
  %480 = vmatprep.subr.bf16.mxu0 0
  %481 = vmatpush1.bf16.msra.mxu0 0
  %482 = vmatprep.subr.bf16.mxu0 0
  %483 = vmatpush1.bf16.msra.mxu0 0
  %484 = vmatprep.mubr.bf16.mxu0 0
  %485 = vmatmul.mubr.bf16.gmra.mrb[0].mxu0 %v368
  %v486 = vpop.f32.mrb[0].mxu0
  %v487 = vadd.f32 %v402, %v486
  %v488 = vpop.f32.mrb[0].mxu0
  %v489 = vpop.f32.mrb[0].mxu0
  %v490 = vadd.f32 %v402, %v489
  %v491 = vpop.f32.mrb[0].mxu0
  %492 = vmatprep.mubr.bf16.mxu0 0
  %493 = vmatmul.mubr.bf16.gmra.mrb[0].mxu0 %v369
  %v494 = vpop.f32.mrb[0].mxu0
  %v495 = vadd.f32 %v402, %v494
  %v496 = vpop.f32.mrb[0].mxu0
  %v497 = vpop.f32.mrb[0].mxu0
  %v498 = vadd.f32 %v402, %v497
  %v499 = vpop.f32.mrb[0].mxu0
  %500 = vmatprep.mubr.bf16.mxu0 0
  %501 = vmatmul.mubr.bf16.gmra.mrb[0].mxu0 %v370
  %v502 = vpop.f32.mrb[0].mxu0
  %v503 = vadd.f32 %v402, %v502
  %v504 = vpop.f32.mrb[0].mxu0
  %v505 = vpop.f32.mrb[0].mxu0
  %v506 = vadd.f32 %v402, %v505
  %v507 = vpop.f32.mrb[0].mxu0
  %508 = vmatprep.mubr.bf16.mxu0 0
  %509 = vmatmul.mubr.bf16.gmra.mrb[0].mxu0 %v371
  %v510 = vpop.f32.mrb[0].mxu0
  %v511 = vadd.f32 %v402, %v510
  %v512 = vpop.f32.mrb[0].mxu0
  %v513 = vpop.f32.mrb[0].mxu0
  %v514 = vadd.f32 %v402, %v513
  %v515 = vpop.f32.mrb[0].mxu0
  %516 = vmatprep.mubr.bf16.mxu0 0
  %517 = vmatmul.mubr.bf16.gmra.mrb[0].mxu0 %v372
  %v518 = vpop.f32.mrb[0].mxu0
  %v519 = vadd.f32 %v402, %v518
  %v520 = vpop.f32.mrb[0].mxu0
  %v521 = vpop.f32.mrb[0].mxu0
  %v522 = vadd.f32 %v402, %v521
  %v523 = vpop.f32.mrb[0].mxu0
  %524 = vmatprep.mubr.bf16.mxu0 0
  %525 = vmatmul.mubr.bf16.gmra.mrb[0].mxu0 %v373
  %v526 = vpop.f32.mrb[0].mxu0
  %v527 = vadd.f32 %v402, %v526
  %v528 = vpop.f32.mrb[0].mxu0
  %v529 = vpop.f32.mrb[0].mxu0
  %v530 = vadd.f32 %v402, %v529
  %v531 = vpop.f32.mrb[0].mxu0
  %532 = vmatprep.mubr.bf16.mxu0 0
  %533 = vmatmul.mubr.bf16.gmra.mrb[0].mxu0 %v374
  %v534 = vpop.f32.mrb[0].mxu0
  %v535 = vadd.f32 %v402, %v534
  %v536 = vpop.f32.mrb[0].mxu0
  %v537 = vpop.f32.mrb[0].mxu0
  %v538 = vadd.f32 %v402, %v537
  %v539 = vpop.f32.mrb[0].mxu0
  %540 = vmatprep.mubr.bf16.mxu0 0
  %541 = vmatmul.mubr.bf16.gmra.mrb[0].mxu0 %v375
  %v542 = vpop.f32.mrb[0].mxu0
  %v543 = vadd.f32 %v402, %v542
  %v544 = vpop.f32.mrb[0].mxu0
  %v545 = vpop.f32.mrb[0].mxu0
  %v546 = vadd.f32 %v402, %v545
  %v547 = vpop.f32.mrb[0].mxu0
  %548 = vmatprep.mubr.bf16.mxu0 0
  %549 = vmatmul.mubr.bf16.gmra.mrb[0].mxu0 %v376
  %v550 = vpop.f32.mrb[0].mxu0
  %v551 = vadd.f32 %v402, %v550
  %v552 = vpop.f32.mrb[0].mxu0
  %v553 = vpop.f32.mrb[0].mxu0
  %v554 = vadd.f32 %v402, %v553
  %v555 = vpop.f32.mrb[0].mxu0
  %556 = vmatprep.mubr.bf16.mxu0 0
  %557 = vmatmul.mubr.bf16.gmra.mrb[0].mxu0 %v377
  %v558 = vpop.f32.mrb[0].mxu0
  %v559 = vadd.f32 %v402, %v558
  %v560 = vpop.f32.mrb[0].mxu0
  %v561 = vpop.f32.mrb[0].mxu0
  %v562 = vadd.f32 %v402, %v561
  %v563 = vpop.f32.mrb[0].mxu0
  %564 = vmatprep.mubr.bf16.mxu0 0
  %565 = vmatmul.mubr.bf16.gmra.mrb[0].mxu0 %v378
  %v566 = vpop.f32.mrb[0].mxu0
  %v567 = vadd.f32 %v402, %v566
  %v568 = vpop.f32.mrb[0].mxu0
  %v569 = vpop.f32.mrb[0].mxu0
  %v570 = vadd.f32 %v402, %v569
  %v571 = vpop.f32.mrb[0].mxu0
  %572 = vmatprep.mubr.bf16.mxu0 0
  %573 = vmatmul.mubr.bf16.gmra.mrb[0].mxu0 %v379
  %v574 = vpop.f32.mrb[0].mxu0
  %v575 = vadd.f32 %v402, %v574
  %v576 = vpop.f32.mrb[0].mxu0
  %v577 = vpop.f32.mrb[0].mxu0
  %v578 = vadd.f32 %v402, %v577
  %v579 = vpop.f32.mrb[0].mxu0
  %580 = vmatprep.mubr.bf16.mxu0 0
  %581 = vmatmul.mubr.bf16.gmra.mrb[0].mxu0 %v380
  %v582 = vpop.f32.mrb[0].mxu0
  %v583 = vadd.f32 %v402, %v582
  %v584 = vpop.f32.mrb[0].mxu0
  %v585 = vpop.f32.mrb[0].mxu0
  %v586 = vadd.f32 %v402, %v585
  %v587 = vpop.f32.mrb[0].mxu0
  %588 = vdwg.mxu0
  %v589 = vmax.f32 %v487, 0.0
  %v590 = vmax.f32 %v490, 0.0
  %v591 = vmax.f32 %v495, 0.0
  %v592 = vmax.f32 %v498, 0.0
  %v593 = vmax.f32 %v503, 0.0
  %v594 = vmax.f32 %v506, 0.0
  %v595 = vmax.f32 %v511, 0.0
  %v596 = vmax.f32 %v514, 0.0
  %v597 = vmax.f32 %v519, 0.0
  %v598 = vmax.f32 %v522, 0.0
  %v599 = vmax.f32 %v527, 0.0
  %v600 = vmax.f32 %v530, 0.0
  %v601 = vmax.f32 %v535, 0.0
  %v602 = vmax.f32 %v538, 0.0
  %v603 = vmax.f32 %v543, 0.0
  %v604 = vmax.f32 %v546, 0.0
  %v605 = vmax.f32 %v551, 0.0
  %v606 = vmax.f32 %v554, 0.0
  %v607 = vmax.f32 %v559, 0.0
  %v608 = vmax.f32 %v562, 0.0
  %v609 = vmax.f32 %v567, 0.0
  %v610 = vmax.f32 %v570, 0.0
  %v611 = vmax.f32 %v575, 0.0
  %v612 = vmax.f32 %v578, 0.0
  %v613 = vmax.f32 %v583, 0.0
  %v614 = vmax.f32 %v586, 0.0
  %s615 = sadd.s32 0, 0
  %s616 = smul.u32 %s615, 208
  %s617 = sadd.s32 %s616, 208
  %p618 = scmp.gt.s32.totalorder %s617, 200
  // Predicated region
  $region30: #{score_model_forward.1} parent=0 // pred_check
    %p619 = pneg %p618
  $region31: #{score_model_forward.1} parent=0 // pred_check_branch
    %621 = sbr.rel (%p619) target = $region33
  $region32: #{score_model_forward.1} parent=0 // pred_region
    %v622 = vlaneseq
    %v623 = vshrl.u32 %v622, 7
    %v624 = vadd.s32 %v623, 8
    %v625 = vadd.s32 %v623, 16
    %v626 = vadd.s32 %v623, 24
    %v627 = vadd.s32 %v623, 32
    %v628 = vadd.s32 %v623, 40
    %v629 = vadd.s32 %v623, 48
    %v630 = vadd.s32 %v623, 56
    %v631 = vadd.s32 %v623, 64
    %v632 = vadd.s32 %v623, 72
    %v633 = vadd.s32 %v623, 80
    %v634 = vadd.s32 %v623, 88
    %v635 = vadd.s32 %v623, 96
    %v636 = vadd.s32 %v623, 104
    %v637 = vadd.s32 %v623, 112
    %v638 = vadd.s32 %v623, 120
    %v639 = vadd.s32 %v623, 128
    %v640 = vadd.s32 %v623, 136
    %v641 = vadd.s32 %v623, 144
    %v642 = vadd.s32 %v623, 152
    %v643 = vadd.s32 %v623, 160
    %v644 = vadd.s32 %v623, 168
    %v645 = vadd.s32 %v623, 176
    %v646 = vadd.s32 %v623, 184
    %v647 = vadd.s32 %v623, 192
    %v648 = vadd.s32 %v623, 200
    %v649 = vstv %s616
    %v650 = vadd.s32 %v649, %v623
    %v651 = vadd.s32 %v649, %v624
    %v652 = vadd.s32 %v649, %v625
    %v653 = vadd.s32 %v649, %v626
    %v654 = vadd.s32 %v649, %v627
    %v655 = vadd.s32 %v649, %v628
    %v656 = vadd.s32 %v649, %v629
    %v657 = vadd.s32 %v649, %v630
    %v658 = vadd.s32 %v649, %v631
    %v659 = vadd.s32 %v649, %v632
    %v660 = vadd.s32 %v649, %v633
    %v661 = vadd.s32 %v649, %v634
    %v662 = vadd.s32 %v649, %v635
    %v663 = vadd.s32 %v649, %v636
    %v664 = vadd.s32 %v649, %v637
    %v665 = vadd.s32 %v649, %v638
    %v666 = vadd.s32 %v649, %v639
    %v667 = vadd.s32 %v649, %v640
    %v668 = vadd.s32 %v649, %v641
    %v669 = vadd.s32 %v649, %v642
    %v670 = vadd.s32 %v649, %v643
    %v671 = vadd.s32 %v649, %v644
    %v672 = vadd.s32 %v649, %v645
    %v673 = vadd.s32 %v649, %v646
    %v674 = vadd.s32 %v649, %v647
    %v675 = vadd.s32 %v649, %v648
    %v676 = vld [vmem:[#allocation2] sm:$0x1]
    %vm677 = vcmp.lt.s32.totalorder %v650, 200
    %vm678 = vcmp.lt.s32.totalorder %v651, 200
    %vm679 = vcmp.lt.s32.totalorder %v652, 200
    %vm680 = vcmp.lt.s32.totalorder %v653, 200
    %vm681 = vcmp.lt.s32.totalorder %v654, 200
    %vm682 = vcmp.lt.s32.totalorder %v655, 200
    %vm683 = vcmp.lt.s32.totalorder %v656, 200
    %vm684 = vcmp.lt.s32.totalorder %v657, 200
    %vm685 = vcmp.lt.s32.totalorder %v658, 200
    %vm686 = vcmp.lt.s32.totalorder %v659, 200
    %vm687 = vcmp.lt.s32.totalorder %v660, 200
    %vm688 = vcmp.lt.s32.totalorder %v661, 200
    %vm689 = vcmp.lt.s32.totalorder %v662, 200
    %vm690 = vcmp.lt.s32.totalorder %v663, 200
    %vm691 = vcmp.lt.s32.totalorder %v664, 200
    %vm692 = vcmp.lt.s32.totalorder %v665, 200
    %vm693 = vcmp.lt.s32.totalorder %v666, 200
    %vm694 = vcmp.lt.s32.totalorder %v667, 200
    %vm695 = vcmp.lt.s32.totalorder %v668, 200
    %vm696 = vcmp.lt.s32.totalorder %v669, 200
    %vm697 = vcmp.lt.s32.totalorder %v670, 200
    %vm698 = vcmp.lt.s32.totalorder %v671, 200
    %vm699 = vcmp.lt.s32.totalorder %v672, 200
    %vm700 = vcmp.lt.s32.totalorder %v673, 200
    %vm701 = vcmp.lt.s32.totalorder %v674, 200
    %vm702 = vcmp.lt.s32.totalorder %v675, 200
    %v703 = vsel %vm677, 1, 0
    %v704 = vsel %vm678, 1, 0
    %v705 = vsel %vm679, 1, 0
    %v706 = vsel %vm680, 1, 0
    %v707 = vsel %vm681, 1, 0
    %v708 = vsel %vm682, 1, 0
    %v709 = vsel %vm683, 1, 0
    %v710 = vsel %vm684, 1, 0
    %v711 = vsel %vm685, 1, 0
    %v712 = vsel %vm686, 1, 0
    %v713 = vsel %vm687, 1, 0
    %v714 = vsel %vm688, 1, 0
    %v715 = vsel %vm689, 1, 0
    %v716 = vsel %vm690, 1, 0
    %v717 = vsel %vm691, 1, 0
    %v718 = vsel %vm692, 1, 0
    %v719 = vsel %vm693, 1, 0
    %v720 = vsel %vm694, 1, 0
    %v721 = vsel %vm695, 1, 0
    %v722 = vsel %vm696, 1, 0
    %v723 = vsel %vm697, 1, 0
    %v724 = vsel %vm698, 1, 0
    %v725 = vsel %vm699, 1, 0
    %v726 = vsel %vm700, 1, 0
    %v727 = vsel %vm701, 1, 0
    %v728 = vsel %vm702, 1, 0
    %vm729 = vcmp.eq.s32.totalorder %v703, 1
    %vm730 = vcmp.eq.s32.totalorder %v704, 1
    %vm731 = vcmp.eq.s32.totalorder %v705, 1
    %vm732 = vcmp.eq.s32.totalorder %v706, 1
    %vm733 = vcmp.eq.s32.totalorder %v707, 1
    %vm734 = vcmp.eq.s32.totalorder %v708, 1
    %vm735 = vcmp.eq.s32.totalorder %v709, 1
    %vm736 = vcmp.eq.s32.totalorder %v710, 1
    %vm737 = vcmp.eq.s32.totalorder %v711, 1
    %vm738 = vcmp.eq.s32.totalorder %v712, 1
    %vm739 = vcmp.eq.s32.totalorder %v713, 1
    %vm740 = vcmp.eq.s32.totalorder %v714, 1
    %vm741 = vcmp.eq.s32.totalorder %v715, 1
    %vm742 = vcmp.eq.s32.totalorder %v716, 1
    %vm743 = vcmp.eq.s32.totalorder %v717, 1
    %vm744 = vcmp.eq.s32.totalorder %v718, 1
    %vm745 = vcmp.eq.s32.totalorder %v719, 1
    %vm746 = vcmp.eq.s32.totalorder %v720, 1
    %vm747 = vcmp.eq.s32.totalorder %v721, 1
    %vm748 = vcmp.eq.s32.totalorder %v722, 1
    %vm749 = vcmp.eq.s32.totalorder %v723, 1
    %vm750 = vcmp.eq.s32.totalorder %v724, 1
    %vm751 = vcmp.eq.s32.totalorder %v725, 1
    %vm752 = vcmp.eq.s32.totalorder %v726, 1
    %vm753 = vcmp.eq.s32.totalorder %v727, 1
    %vm754 = vcmp.eq.s32.totalorder %v728, 1
    %v755 = vsel %vm729, %v589, 0.0
    %v756 = vsel %vm730, %v590, 0.0
    %v757 = vsel %vm731, %v591, 0.0
    %v758 = vsel %vm732, %v592, 0.0
    %v759 = vsel %vm733, %v593, 0.0
    %v760 = vsel %vm734, %v594, 0.0
    %v761 = vsel %vm735, %v595, 0.0
    %v762 = vsel %vm736, %v596, 0.0
    %v763 = vsel %vm737, %v597, 0.0
    %v764 = vsel %vm738, %v598, 0.0
    %v765 = vsel %vm739, %v599, 0.0
    %v766 = vsel %vm740, %v600, 0.0
    %v767 = vsel %vm741, %v601, 0.0
    %v768 = vsel %vm742, %v602, 0.0
    %v769 = vsel %vm743, %v603, 0.0
    %v770 = vsel %vm744, %v604, 0.0
    %v771 = vsel %vm745, %v605, 0.0
    %v772 = vsel %vm746, %v606, 0.0
    %v773 = vsel %vm747, %v607, 0.0
    %v774 = vsel %vm748, %v608, 0.0
    %v775 = vsel %vm749, %v609, 0.0
    %v776 = vsel %vm750, %v610, 0.0
    %v777 = vsel %vm751, %v611, 0.0
    %v778 = vsel %vm752, %v612, 0.0
    %v779 = vsel %vm753, %v613, 0.0
    %v780 = vsel %vm754, %v614, 0.0
    %v781 = vadd.f32 %v755, %v756
    %v782 = vadd.f32 %v781, %v757
    %v783 = vadd.f32 %v782, %v758
    %v784 = vadd.f32 %v783, %v759
    %v785 = vadd.f32 %v784, %v760
    %v786 = vadd.f32 %v785, %v761
    %v787 = vadd.f32 %v786, %v762
    %v788 = vadd.f32 %v787, %v763
    %v789 = vadd.f32 %v788, %v764
    %v790 = vadd.f32 %v789, %v765
    %v791 = vadd.f32 %v790, %v766
    %v792 = vadd.f32 %v791, %v767
    %v793 = vadd.f32 %v792, %v768
    %v794 = vadd.f32 %v793, %v769
    %v795 = vadd.f32 %v794, %v770
    %v796 = vadd.f32 %v795, %v771
    %v797 = vadd.f32 %v796, %v772
    %v798 = vadd.f32 %v797, %v773
    %v799 = vadd.f32 %v798, %v774
    %v800 = vadd.f32 %v799, %v775
    %v801 = vadd.f32 %v800, %v776
    %v802 = vadd.f32 %v801, %v777
    %v803 = vadd.f32 %v802, %v778
    %v804 = vadd.f32 %v803, %v779
    %v805 = vadd.f32 %v804, %v780
    %v806 = vrot.slane %v805, 4
    %v807 = vadd.f32 %v805, %v806
    %v808 = vrot.slane %v807, 2
    %v809 = vadd.f32 %v807, %v808
    %v810 = vrot.slane %v809, 1
    %v811 = vadd.f32 %v809, %v810
    %v812 = vadd.f32 %v676, %v811
    %813 = vst [vmem:[#allocation2] sm:$0x1] %v812
  $region33: #{score_model_forward.1} parent=0 // pred_fallthru
    _
  %p814 = scmp.le.s32.totalorder %s617, 200
  // Predicated region
  $region34: #{score_model_forward.1} parent=0 // pred_check
    %p815 = pneg %p814
  $region35: #{score_model_forward.1} parent=0 // pred_check_branch
    %817 = sbr.rel (%p815) target = $region37
  $region36: #{score_model_forward.1} parent=0 // pred_region
    %v818 = vld [vmem:[#allocation2] sm:$0x1]
    %v819 = vadd.f32 %v589, %v590
    %v820 = vadd.f32 %v819, %v591
    %v821 = vadd.f32 %v820, %v592
    %v822 = vadd.f32 %v821, %v593
    %v823 = vadd.f32 %v822, %v594
    %v824 = vadd.f32 %v823, %v595
    %v825 = vadd.f32 %v824, %v596
    %v826 = vadd.f32 %v825, %v597
    %v827 = vadd.f32 %v826, %v598
    %v828 = vadd.f32 %v827, %v599
    %v829 = vadd.f32 %v828, %v600
    %v830 = vadd.f32 %v829, %v601
    %v831 = vadd.f32 %v830, %v602
    %v832 = vadd.f32 %v831, %v603
    %v833 = vadd.f32 %v832, %v604
    %v834 = vadd.f32 %v833, %v605
    %v835 = vadd.f32 %v834, %v606
    %v836 = vadd.f32 %v835, %v607
    %v837 = vadd.f32 %v836, %v608
    %v838 = vadd.f32 %v837, %v609
    %v839 = vadd.f32 %v838, %v610
    %v840 = vadd.f32 %v839, %v611
    %v841 = vadd.f32 %v840, %v612
    %v842 = vadd.f32 %v841, %v613
    %v843 = vadd.f32 %v842, %v614
    %v844 = vrot.slane %v843, 4
    %v845 = vadd.f32 %v843, %v844
    %v846 = vrot.slane %v845, 2
    %v847 = vadd.f32 %v845, %v846
    %v848 = vrot.slane %v847, 1
    %v849 = vadd.f32 %v847, %v848
    %v850 = vadd.f32 %v818, %v849
    %851 = vst [vmem:[#allocation2] sm:$0x1] %v850
  $region37: #{score_model_forward.1} parent=0 // pred_fallthru
    _
  // Predicated region
  $region38: #{score_model_forward.1} parent=0 // pred_check
    %p852 = pneg %p46
  $region39: #{score_model_forward.1} parent=0 // pred_check_branch
    %854 = sbr.rel (%p852) target = $region41
  $region40: #{score_model_forward.1} parent=0 // pred_region
    %v855 = vld [vmem:[#allocation2] sm:$0x1]
    %v856 = vld [vmem:[%s5] sm:$0xff]
    %v857 = vld [vmem:[%s5 + $0x8] sm:$0xff]
    %v858 = vld [vmem:[%s5 + $0x10] sm:$0xff]
    %v859 = vld [vmem:[%s5 + $0x18] sm:$0xff]
    %v860 = vld [vmem:[%s5 + $0x20] sm:$0xff]
    %v861 = vld [vmem:[%s5 + $0x28] sm:$0xff]
    %v862 = vld [vmem:[%s5 + $0x30] sm:$0xff]
    %v863 = vld [vmem:[%s5 + $0x38] sm:$0xff]
    %v864 = vld [vmem:[%s5 + $0x40] sm:$0xff]
    %v865 = vld [vmem:[%s5 + $0x48] sm:$0xff]
    %v866 = vld [vmem:[%s5 + $0x50] sm:$0xff]
    %v867 = vld [vmem:[%s5 + $0x58] sm:$0xff]
    %v868 = vld [vmem:[%s5 + $0x60] sm:$0xff]
    %v869 = vld [vmem:[%s5 + $0x68] sm:$0xff]
    %v870 = vld [vmem:[%s5 + $0x70] sm:$0xff]
    %v871 = vld [vmem:[%s5 + $0x78] sm:$0xff]
    %872 = vmatprep.subr.mxu0 0.0
    %873 = vmatpush1.msra.mxu0 %v856
    %874 = vmatprep.subr.mxu0 0.0
    %875 = vmatpush1.msra.mxu0 %v857
    %876 = vmatprep.subr.mxu0 0.0
    %877 = vmatpush1.msra.mxu0 %v858
    %878 = vmatprep.subr.mxu0 0.0
    %879 = vmatpush1.msra.mxu0 %v859
    %880 = vmatprep.subr.mxu0 0.0
    %881 = vmatpush1.msra.mxu0 %v860
    %882 = vmatprep.subr.mxu0 0.0
    %883 = vmatpush1.msra.mxu0 %v861
    %884 = vmatprep.subr.mxu0 0.0
    %885 = vmatpush1.msra.mxu0 %v862
    %886 = vmatprep.subr.mxu0 0.0
    %887 = vmatpush1.msra.mxu0 %v863
    %888 = vmatprep.subr.mxu0 0.0
    %889 = vmatpush1.msra.mxu0 %v864
    %890 = vmatprep.subr.mxu0 0.0
    %891 = vmatpush1.msra.mxu0 %v865
    %892 = vmatprep.subr.mxu0 0.0
    %893 = vmatpush1.msra.mxu0 %v866
    %894 = vmatprep.subr.mxu0 0.0
    %895 = vmatpush1.msra.mxu0 %v867
    %896 = vmatprep.subr.mxu0 0.0
    %897 = vmatpush1.msra.mxu0 %v868
    %898 = vmatprep.subr.mxu0 0.0
    %899 = vmatpush1.msra.mxu0 %v869
    %900 = vmatprep.subr.mxu0 0.0
    %901 = vmatpush1.msra.mxu0 %v870
    %902 = vmatprep.subr.mxu0 0.0
    %903 = vmatpush1.msra.mxu0 %v871
    %904 = vmatprep.subr.mxu0 0.0
    %905 = vmatpush1.msra.mxu0 0.0
    %906 = vmatprep.subr.mxu0 0.0
    %907 = vmatpush1.msra.mxu0 0.0
    %908 = vmatprep.subr.mxu0 0.0
    %909 = vmatpush1.msra.mxu0 0.0
    %910 = vmatprep.subr.mxu0 0.0
    %911 = vmatpush1.msra.mxu0 0.0
    %912 = vmatprep.subr.mxu0 0.0
    %913 = vmatpush1.msra.mxu0 0.0
    %914 = vmatprep.subr.mxu0 0.0
    %915 = vmatpush1.msra.mxu0 0.0
    %916 = vmatprep.subr.mxu0 0.0
    %917 = vmatpush1.msra.mxu0 0.0
    %918 = vmatprep.subr.mxu0 0.0
    %919 = vmatpush1.msra.mxu0 0.0
    %920 = vmatprep.subr.mxu0 0.0
    %921 = vmatpush1.msra.mxu0 0.0
    %922 = vmatprep.subr.mxu0 0.0
    %923 = vmatpush1.msra.mxu0 0.0
    %924 = vmatprep.subr.mxu0 0.0
    %925 = vmatpush1.msra.mxu0 0.0
    %926 = vmatprep.subr.mxu0 0.0
    %927 = vmatpush1.msra.mxu0 0.0
    %928 = vmatprep.subr.mxu0 0.0
    %929 = vmatpush1.msra.mxu0 0.0
    %930 = vmatprep.subr.mxu0 0.0
    %931 = vmatpush1.msra.mxu0 0.0
    %932 = vmatprep.subr.mxu0 0.0
    %933 = vmatpush1.msra.mxu0 0.0
    %934 = vmatprep.subr.mxu0 0.0
    %935 = vmatpush1.msra.mxu0 0.0
    %936 = vmatprep.mubr.f32.mxu0 0.0
    %937 = vmatmul.mubr.f32.gmra.mrb[0].mxu0 %v855
    %v938 = vpop.f32.mrb[0].mxu0
    %v939 = vadd.f32 0.0, %v938
    %v940 = vpop.f32.mrb[0].mxu0
    %941 = vdwg.mxu0
    %942 = vst [vmem:[%s6] sm:$0x1] %v939
  $region41: #{score_model_forward.1} parent=0 // pred_fallthru
    _
  // Predicated region
  $region42: #{score_model_forward.1} parent=0 // pred_check
    _
  $region43: #{score_model_forward.1} parent=0 // pred_check_branch
    %944 = sbr.rel (0) target = $region45
  $region44: #{score_model_forward.1} parent=0 // pred_region
    _
  $region45: #{score_model_forward.1} parent=0 // pred_fallthru
    _
  // Predicated region
  $region46: #{score_model_forward.1} parent=0 // pred_check
    _
  $region47: #{score_model_forward.1} parent=0 // pred_check_branch
    %946 = sbr.rel (0) target = $region49
  $region48: #{score_model_forward.1} parent=0 // pred_region
    _
  $region49: #{score_model_forward.1} parent=0 // pred_fallthru
    _

</llo_original>
